<compile_context>
chip_gen: v7x
topology: tpu7x:2x2x1
jax: 0.10.0
libtpu: 0.0.40
codegen_flags: <defaults>
</compile_context>

<pallas_src>
import jax
import jax.numpy as jnp
from jax.experimental import pallas as pl
from jax.experimental.pallas import tpu as pltpu

_HIDDEN = 64  # per-MLP hidden width (matches the PyTorch module)
_VMEM = pl.BlockSpec(memory_space=pltpu.MemorySpace.VMEM)


def _round_up(x, m):
    return ((x + m - 1) // m) * m


def _packed_kernel(x_ref, w1_ref, b1_ref, w2_ref, b2_ref, out_ref):
    """Both MLPs fused: one (B,128)@(128,128) + LeakyReLU + one (B,128)@(128,128)."""
    h = jnp.dot(x_ref[...], w1_ref[...], preferred_element_type=jnp.float32) + b1_ref[...]
    # nn.LeakyReLU() default negative_slope = 0.01 (single VALU max).
    h = jnp.maximum(h, 0.01 * h)
    out = jnp.dot(h, w2_ref[...], preferred_element_type=jnp.float32) + b2_ref[...]
    out_ref[...] = out.astype(out_ref.dtype)


def pack_params(params, latent_dim, action_dim, hidden=_HIDDEN):
    """Pack the 8 Linear tensors into lane-dense W1/b1/W2/b2 slabs (hoistable)."""
    iw1, ib1, iw2, ib2 = params["inverse"]   # (2L,H) (1,H) (H,A) (1,A)
    fw1, fb1, fw2, fb2 = params["forward"]   # (L+A,H) (1,H) (H,L) (1,L)
    L, A, H = latent_dim, action_dim, hidden

    in_p = _round_up(2 * L + A, 128)         # packed input width
    hid_p = _round_up(2 * H, 128)            # packed hidden width (128 for H=64)
    out_p = _round_up(A + L, 128)            # packed output width

    # First layer: columns [0:H) inverse hidden, columns [H:2H) forward hidden.
    # Row blocks of X: [0:L)=obs, [L:2L)=next_obs, [2L:2L+A)=action, rest zero-pad.
    w1 = jnp.zeros((in_p, hid_p), jnp.float32)
    w1 = w1.at[0:L, 0:H].set(iw1[0:L])                 # obs      -> inverse
    w1 = w1.at[L:2 * L, 0:H].set(iw1[L:2 * L])         # next_obs -> inverse
    w1 = w1.at[0:L, H:2 * H].set(fw1[0:L])             # obs      -> forward
    w1 = w1.at[2 * L:2 * L + A, H:2 * H].set(fw1[L:L + A])  # action -> forward
    b1 = jnp.zeros((1, hid_p), jnp.float32)
    b1 = b1.at[:, 0:H].set(ib1).at[:, H:2 * H].set(fb1)

    # Second layer: block-diagonal. Output columns [0:A)=pred_action, [A:A+L)=pred_next_obs.
    w2 = jnp.zeros((hid_p, out_p), jnp.float32)
    w2 = w2.at[0:H, 0:A].set(iw2)
    w2 = w2.at[H:2 * H, A:A + L].set(fw2)
    b2 = jnp.zeros((1, out_p), jnp.float32)
    b2 = b2.at[:, 0:A].set(ib2).at[:, A:A + L].set(fb2)
    return w1, b1, w2, b2


def _pack_activations(obs, action, next_obs, in_p):
    """X = [obs | next_obs | action | 0-pad] as one lane-dense (B, in_p) slab."""
    B = obs.shape[0]
    pad = in_p - (obs.shape[1] + next_obs.shape[1] + action.shape[1])
    parts = [obs.astype(jnp.float32), next_obs.astype(jnp.float32),
             action.astype(jnp.float32)]
    if pad:
        parts.append(jnp.zeros((B, pad), jnp.float32))
    return jnp.concatenate(parts, axis=1)


def inverse_forward_dynamics(params, obs, action, next_obs, training=True):
    """Mirrors InverseForwardDynamicsModel.forward (training and eval paths)."""
    B, latent_dim = obs.shape
    action_dim = action.shape[1]
    L, A = latent_dim, action_dim

    w1, b1, w2, b2 = pack_params(params, L, A)
    in_p = w1.shape[0]
    out_p = w2.shape[1]

    if training:
        x = _pack_activations(obs, action, next_obs, in_p)
    else:
        # Eval path only needs the forward model; next_obs slots are zeroed
        # (the inverse columns compute on zeros — negligible, keeps one kernel).
        x = _pack_activations(obs, action, jnp.zeros_like(obs), in_p)

    out = pl.pallas_call(
        _packed_kernel,
        out_shape=jax.ShapeDtypeStruct((B, out_p), jnp.float32),
        in_specs=[_VMEM] * 5,
        out_specs=_VMEM,
    )(x, w1, b1, w2, b2)

    pred_next_obs = out[:, A:A + L]
    if training:
        pred_action = out[:, 0:A]
        return pred_action, pred_next_obs
    return pred_next_obs

    # TODO(synk): once batch reaches several hundred rows, add a batch grid
    # axis with dimension_semantics=("parallel",) (v7x dual TensorCore) with a
    # constant index_map for the weight slabs, and consider bf16 slabs on
    # v6e/v7x; unnecessary (pure overhead) at these shapes.


def init_params(key, latent_dim, action_dim, hidden=_HIDDEN):
    """Deterministic synthetic parameter init (shapes match the PyTorch __init__)."""
    ks = jax.random.split(key, 8)

    def lin(kw, kb, fan_in, fan_out):
        # Uniform(-1/sqrt(fan_in), 1/sqrt(fan_in)) like torch's default Linear init.
        bound = 1.0 / jnp.sqrt(jnp.float32(fan_in))
        w = jax.random.uniform(kw, (fan_in, fan_out), jnp.float32, -bound, bound)
        b = jax.random.uniform(kb, (1, fan_out), jnp.float32, -bound, bound)
        return w, b

    inv_w1, inv_b1 = lin(ks[0], ks[1], latent_dim * 2, hidden)
    inv_w2, inv_b2 = lin(ks[2], ks[3], hidden, action_dim)
    fwd_w1, fwd_b1 = lin(ks[4], ks[5], latent_dim + action_dim, hidden)
    fwd_w2, fwd_b2 = lin(ks[6], ks[7], hidden, latent_dim)
    return {
        "inverse": (inv_w1, inv_b1, inv_w2, inv_b2),
        "forward": (fwd_w1, fwd_b1, fwd_w2, fwd_b2),
    }


def _reference(params, obs, action, next_obs):
    """Pure-JAX reference for correctness check."""
    def mlp(x, w1, b1, w2, b2):
        h = x @ w1 + b1
        h = jnp.where(h >= 0, h, 0.01 * h)
        return h @ w2 + b2

    pa = mlp(jnp.concatenate([obs, next_obs], axis=1), *params["inverse"])
    pn = mlp(jnp.concatenate([obs, action], axis=-1), *params["forward"])
    return pa, pn


if __name__ == "__main__":
    batch = 8
    latent_dim = 32
    action_dim = 4

    key = jax.random.PRNGKey(0)
    k_obs, k_act, k_next, k_params = jax.random.split(key, 4)

    obs = jax.random.normal(k_obs, (batch, latent_dim), jnp.float32)
    action = jax.random.normal(k_act, (batch, action_dim), jnp.float32)
    next_obs = jax.random.normal(k_next, (batch, latent_dim), jnp.float32)

    params = init_params(k_params, latent_dim, action_dim)

    pred_action, pred_next_obs = inverse_forward_dynamics(
        params, obs, action, next_obs, training=True
    )
    jax.block_until_ready((pred_action, pred_next_obs))

    # Shape checks against the PyTorch module semantics.
    assert pred_action.shape == (batch, action_dim)
    assert pred_next_obs.shape == (batch, latent_dim)

    # Numerical check vs. pure-JAX reference.
    ref_a, ref_n = _reference(params, obs, action, next_obs)
    assert jnp.allclose(pred_action, ref_a, atol=1e-5, rtol=1e-5)
    assert jnp.allclose(pred_next_obs, ref_n, atol=1e-5, rtol=1e-5)

    # Eval path (training=False) — forward model only, next_obs unused.
    pn_eval = inverse_forward_dynamics(params, obs, action, next_obs, training=False)
    jax.block_until_ready(pn_eval)
    assert pn_eval.shape == (batch, latent_dim)
    assert jnp.allclose(pn_eval, ref_n, atol=1e-5, rtol=1e-5)

    print("KERNEL_OK")
</pallas_src>

<mosaic_0001>
module attributes {stable_mosaic.version = 11 : i64} {
  func.func @_packed_kernel(%arg0: memref<8x128xf32, #tpu.memory_space<vmem>>, %arg1: memref<128x128xf32, #tpu.memory_space<vmem>>, %arg2: memref<1x128xf32, #tpu.memory_space<vmem>>, %arg3: memref<128x128xf32, #tpu.memory_space<vmem>>, %arg4: memref<1x128xf32, #tpu.memory_space<vmem>>, %arg5: memref<8x128xf32, #tpu.memory_space<vmem>>) attributes {dimension_semantics = [], scalar_prefetch = 0 : i64, scratch_operands = 0 : i64, tpu.core_type = #tpu.core_type<tc>} {
    %c0 = arith.constant 0 : index
    %c0_0 = arith.constant 0 : index
    %0 = vector.load %arg0[%c0, %c0_0] : memref<8x128xf32, #tpu.memory_space<vmem>>, vector<8x128xf32>
    %c0_1 = arith.constant 0 : index
    %c0_2 = arith.constant 0 : index
    %1 = vector.load %arg1[%c0_1, %c0_2] : memref<128x128xf32, #tpu.memory_space<vmem>>, vector<128x128xf32>
    %cst = arith.constant dense<0.000000e+00> : vector<8x128xf32>
    %2 = tpu.matmul %0, %1, %cst {dimension_numbers = #tpu.dot_dimension_numbers<[1], [0], [0], [1], [0, 0, 1, 1], [], []>} : vector<8x128xf32>, vector<128x128xf32>, vector<8x128xf32> -> vector<8x128xf32>
    %c0_3 = arith.constant 0 : index
    %c0_4 = arith.constant 0 : index
    %3 = vector.load %arg2[%c0_3, %c0_4] : memref<1x128xf32, #tpu.memory_space<vmem>>, vector<1x128xf32>
    %4 = vector.broadcast %3 : vector<1x128xf32> to vector<8x128xf32>
    %5 = arith.addf %2, %4 : vector<8x128xf32>
    %cst_5 = arith.constant 0.00999999977 : f32
    %6 = vector.broadcast %cst_5 : f32 to vector<8x128xf32>
    %7 = arith.mulf %6, %5 : vector<8x128xf32>
    %8 = arith.maximumf %5, %7 : vector<8x128xf32>
    %c0_6 = arith.constant 0 : index
    %c0_7 = arith.constant 0 : index
    %9 = vector.load %arg3[%c0_6, %c0_7] : memref<128x128xf32, #tpu.memory_space<vmem>>, vector<128x128xf32>
    %cst_8 = arith.constant dense<0.000000e+00> : vector<8x128xf32>
    %10 = tpu.matmul %8, %9, %cst_8 {dimension_numbers = #tpu.dot_dimension_numbers<[1], [0], [0], [1], [0, 0, 1, 1], [], []>} : vector<8x128xf32>, vector<128x128xf32>, vector<8x128xf32> -> vector<8x128xf32>
    %c0_9 = arith.constant 0 : index
    %c0_10 = arith.constant 0 : index
    %11 = vector.load %arg4[%c0_9, %c0_10] : memref<1x128xf32, #tpu.memory_space<vmem>>, vector<1x128xf32>
    %12 = vector.broadcast %11 : vector<1x128xf32> to vector<8x128xf32>
    %13 = arith.addf %10, %12 : vector<8x128xf32>
    %c0_11 = arith.constant 0 : index
    %c0_12 = arith.constant 0 : index
    %14 = vector.load %arg5[%c0_11, %c0_12] : memref<8x128xf32, #tpu.memory_space<vmem>>, vector<8x128xf32>
    tpu.vector_store %arg5[%c0_11, %c0_12], %13 {strides = array<i32>} : memref<8x128xf32, #tpu.memory_space<vmem>>, vector<8x128xf32>,
    return
  }
}

</mosaic_0001>

<llo_original>
// kernel: tpu_custom_call.1
$region0: #{tpu_custom_call.1}
  #allocation0 [shape = 'u32[]', space=smem, size = 0x4, offset = 0x4, fixed_abs, tag = 'smem constant byte address 0x4 - core index']
  #allocation1 [shape = 'u32[144,128]{1,0:T(1,128)}', space=vmem, size = 0x12000, scoped, tag = 'internal scratch']
  %s0 = inlined_call_operand.hbm [shape: f32[8,128], index: 0, kind: input, shape index: {}]
  %s1 = inlined_call_operand.hbm [shape: f32[128,128], index: 1, kind: input, shape index: {}]
  %s2 = inlined_call_operand.vmem [shape: f32[1,128], index: 2, kind: input, shape index: {}]
  %s3 = inlined_call_operand.hbm [shape: f32[128,128], index: 3, kind: input, shape index: {}]
  %s4 = inlined_call_operand.vmem [shape: f32[1,128], index: 4, kind: input, shape index: {}]
  %s5 = inlined_call_operand.hbm [shape: f32[8,128], index: 5, kind: output, shape index: {}]
  %s6 = sld [smem:[#allocation0]]
  $region42: #{tpu_custom_call.1} parent=0
    _
  %s8 = ssub.s32 1, %s6
  %s9 = scalar_select 0, %s8, %s6
  $region1: #{tpu_custom_call.1} parent=0
    #allocation2 [shape = 'u8[4096]{0}', space=vmem, size = 0x1000, scoped, tag = 'input window, operand 0, single buffered']
    #allocation3 [shape = 's32[1]{0}', space=sflag, size = 0x4, scoped, tag = 'scoped memory for tpu_custom_call.1']
    #allocation4 [shape = 's32[1]{0}', space=sflag, size = 0x4, scoped, tag = 'scoped memory for tpu_custom_call.1']
    #allocation5 [shape = 'u8[65536]{0}', space=vmem, size = 0x10000, scoped, tag = 'input window, operand 1, single buffered']
    #allocation6 [shape = 's32[1]{0}', space=sflag, size = 0x4, scoped, tag = 'scoped memory for tpu_custom_call.1']
    #allocation7 [shape = 'u8[65536]{0}', space=vmem, size = 0x10000, scoped, tag = 'input window, operand 3, single buffered']
    #allocation8 [shape = 'u8[4096]{0}', space=vmem, size = 0x1000, scoped, tag = 'output window, operand 0, single buffered']
    %10 = vsyncpa [#allocation3], 0
    %11 = vsyncpa [#allocation6], 0
    %12 = vsyncpa [#allocation4], 0
    // Predicated region
    $region2: #{tpu_custom_call.1} parent=1 // pred_check
      _
    $region3: #{tpu_custom_call.1} parent=1 // pred_check_branch
      %14 = sbr.rel (0) target = $region5
    $region4: #{tpu_custom_call.1} parent=1 // pred_region
      %s16 = ssub.s32 128, 128
      %17 = vsyncadd [#allocation3], %s16
      %s19 = sshll.u32 [#allocation2], 4
      %s20 = int_to_ptr.vmem [resolvable:$true] %s19
      %22 = dma.hbm_to_vmem [thread:$0]  %s0, 128, %s20, [#allocation3]
    $region5: #{tpu_custom_call.1} parent=1 // pred_fallthru
      _
    // Predicated region
    $region6: #{tpu_custom_call.1} parent=1 // pred_check
      _
    $region7: #{tpu_custom_call.1} parent=1 // pred_check_branch
      %24 = sbr.rel (0) target = $region9
    $region8: #{tpu_custom_call.1} parent=1 // pred_region
      %s26 = ssub.s32 2048, 2048
      %27 = vsyncadd [#allocation6], %s26
      %s28 = sshll.u32 [#allocation5], 4
      %s29 = int_to_ptr.vmem [resolvable:$true] %s28
      %34 = dma.hbm_to_vmem [thread:$0]  %s1, 2048, %s29, [#allocation6], 128, 128, 8
    $region9: #{tpu_custom_call.1} parent=1 // pred_fallthru
      _
    // Predicated region
    $region10: #{tpu_custom_call.1} parent=1 // pred_check
      _
    $region11: #{tpu_custom_call.1} parent=1 // pred_check_branch
      %36 = sbr.rel (0) target = $region13
    $region12: #{tpu_custom_call.1} parent=1 // pred_region
      _
    $region13: #{tpu_custom_call.1} parent=1 // pred_fallthru
      _
    // Predicated region
    $region14: #{tpu_custom_call.1} parent=1 // pred_check
      _
    $region15: #{tpu_custom_call.1} parent=1 // pred_check_branch
      %38 = sbr.rel (0) target = $region17
    $region16: #{tpu_custom_call.1} parent=1 // pred_region
      %s40 = ssub.s32 2048, 2048
      %41 = vsyncadd [#allocation6], %s40
      %s42 = sshll.u32 [#allocation7], 4
      %s43 = int_to_ptr.vmem [resolvable:$true] %s42
      %48 = dma.hbm_to_vmem [thread:$0]  %s3, 2048, %s43, [#allocation6], 128, 128, 8
    $region17: #{tpu_custom_call.1} parent=1 // pred_fallthru
      _
    // Predicated region
    $region18: #{tpu_custom_call.1} parent=1 // pred_check
      _
    $region19: #{tpu_custom_call.1} parent=1 // pred_check_branch
      %50 = sbr.rel (0) target = $region21
    $region20: #{tpu_custom_call.1} parent=1 // pred_region
      _
    $region21: #{tpu_custom_call.1} parent=1 // pred_fallthru
      _
    // Predicated region
    $region22: #{tpu_custom_call.1} parent=1 // pred_check
      _
    $region23: #{tpu_custom_call.1} parent=1 // pred_check_branch
      %52 = sbr.rel (0) target = $region25
    $region24: #{tpu_custom_call.1} parent=1 // pred_region
      %53 = dma.done [#allocation3], 128
    $region25: #{tpu_custom_call.1} parent=1 // pred_fallthru
      _
    // Predicated region
    $region26: #{tpu_custom_call.1} parent=1 // pred_check
      _
    $region27: #{tpu_custom_call.1} parent=1 // pred_check_branch
      %55 = sbr.rel (0) target = $region29
    $region28: #{tpu_custom_call.1} parent=1 // pred_region
      %56 = dma.done [#allocation6], 2048
    $region29: #{tpu_custom_call.1} parent=1 // pred_fallthru
      _
    // Predicated region
    $region30: #{tpu_custom_call.1} parent=1 // pred_check
      _
    $region31: #{tpu_custom_call.1} parent=1 // pred_check_branch
      %58 = sbr.rel (0) target = $region33
    $region32: #{tpu_custom_call.1} parent=1 // pred_region
      %59 = dma.done [#allocation6], 2048
    $region33: #{tpu_custom_call.1} parent=1 // pred_fallthru
      _
    %v60 = vld [vmem:[#allocation2] sm:$0xff]
    %v61 = vld [vmem:[#allocation5] sm:$0xff]
    %v62 = vld [vmem:[#allocation5 + $0x8] sm:$0xff]
    %v63 = vld [vmem:[#allocation5 + $0x10] sm:$0xff]
    %v64 = vld [vmem:[#allocation5 + $0x18] sm:$0xff]
    %v65 = vld [vmem:[#allocation5 + $0x20] sm:$0xff]
    %v66 = vld [vmem:[#allocation5 + $0x28] sm:$0xff]
    %v67 = vld [vmem:[#allocation5 + $0x30] sm:$0xff]
    %v68 = vld [vmem:[#allocation5 + $0x38] sm:$0xff]
    %v69 = vld [vmem:[#allocation5 + $0x40] sm:$0xff]
    %v70 = vld [vmem:[#allocation5 + $0x48] sm:$0xff]
    %v71 = vld [vmem:[#allocation5 + $0x50] sm:$0xff]
    %v72 = vld [vmem:[#allocation5 + $0x58] sm:$0xff]
    %v73 = vld [vmem:[#allocation5 + $0x60] sm:$0xff]
    %v74 = vld [vmem:[#allocation5 + $0x68] sm:$0xff]
    %v75 = vld [vmem:[#allocation5 + $0x70] sm:$0xff]
    %v76 = vld [vmem:[#allocation5 + $0x78] sm:$0xff]
    %v77 = vld [vmem:[%s2] sm:$0x1]
    %v79 = vlaneseq
    %v80 = vshrl.u32 %v79, 7
    %v81 = vsub.s32 0, %v80
    %v82 = vrot.slane %v77, %v81
    %84 = vmatprep.subr.mxu0 0.0
    %85 = vmatpush1.msra.mxu0 %v61
    %86 = vmatprep.subr.mxu0 0.0
    %87 = vmatpush1.msra.mxu0 %v62
    %88 = vmatprep.subr.mxu0 0.0
    %89 = vmatpush1.msra.mxu0 %v63
    %90 = vmatprep.subr.mxu0 0.0
    %91 = vmatpush1.msra.mxu0 %v64
    %92 = vmatprep.subr.mxu0 0.0
    %93 = vmatpush1.msra.mxu0 %v65
    %94 = vmatprep.subr.mxu0 0.0
    %95 = vmatpush1.msra.mxu0 %v66
    %96 = vmatprep.subr.mxu0 0.0
    %97 = vmatpush1.msra.mxu0 %v67
    %98 = vmatprep.subr.mxu0 0.0
    %99 = vmatpush1.msra.mxu0 %v68
    %100 = vmatprep.subr.mxu0 0.0
    %101 = vmatpush1.msra.mxu0 %v69
    %102 = vmatprep.subr.mxu0 0.0
    %103 = vmatpush1.msra.mxu0 %v70
    %104 = vmatprep.subr.mxu0 0.0
    %105 = vmatpush1.msra.mxu0 %v71
    %106 = vmatprep.subr.mxu0 0.0
    %107 = vmatpush1.msra.mxu0 %v72
    %108 = vmatprep.subr.mxu0 0.0
    %109 = vmatpush1.msra.mxu0 %v73
    %110 = vmatprep.subr.mxu0 0.0
    %111 = vmatpush1.msra.mxu0 %v74
    %112 = vmatprep.subr.mxu0 0.0
    %113 = vmatpush1.msra.mxu0 %v75
    %114 = vmatprep.subr.mxu0 0.0
    %115 = vmatpush1.msra.mxu0 %v76
    %116 = vmatprep.subr.mxu0 0.0
    %117 = vmatpush1.msra.mxu0 0.0
    %118 = vmatprep.subr.mxu0 0.0
    %119 = vmatpush1.msra.mxu0 0.0
    %120 = vmatprep.subr.mxu0 0.0
    %121 = vmatpush1.msra.mxu0 0.0
    %122 = vmatprep.subr.mxu0 0.0
    %123 = vmatpush1.msra.mxu0 0.0
    %124 = vmatprep.subr.mxu0 0.0
    %125 = vmatpush1.msra.mxu0 0.0
    %126 = vmatprep.subr.mxu0 0.0
    %127 = vmatpush1.msra.mxu0 0.0
    %128 = vmatprep.subr.mxu0 0.0
    %129 = vmatpush1.msra.mxu0 0.0
    %130 = vmatprep.subr.mxu0 0.0
    %131 = vmatpush1.msra.mxu0 0.0
    %132 = vmatprep.subr.mxu0 0.0
    %133 = vmatpush1.msra.mxu0 0.0
    %134 = vmatprep.subr.mxu0 0.0
    %135 = vmatpush1.msra.mxu0 0.0
    %136 = vmatprep.subr.mxu0 0.0
    %137 = vmatpush1.msra.mxu0 0.0
    %138 = vmatprep.subr.mxu0 0.0
    %139 = vmatpush1.msra.mxu0 0.0
    %140 = vmatprep.subr.mxu0 0.0
    %141 = vmatpush1.msra.mxu0 0.0
    %142 = vmatprep.subr.mxu0 0.0
    %143 = vmatpush1.msra.mxu0 0.0
    %144 = vmatprep.subr.mxu0 0.0
    %145 = vmatpush1.msra.mxu0 0.0
    %146 = vmatprep.subr.mxu0 0.0
    %147 = vmatpush1.msra.mxu0 0.0
    %148 = vmatprep.mubr.f32.mxu0 0.0
    %149 = vmatmul.mubr.f32.gmra.mrb[0].mxu0 %v60
    %v150 = vpop.f32.mrb[0].mxu0
    %v151 = vadd.f32 %v82, %v150
    %v152 = vpop.f32.mrb[0].mxu0
    %153 = vdwg.mxu0
    %v154 = vmul.f32 %v151, 0.01
    %v155 = vmax.f32 %v151, %v154
    %v156 = vld [vmem:[#allocation7] sm:$0xff]
    %v157 = vld [vmem:[#allocation7 + $0x8] sm:$0xff]
    %v158 = vld [vmem:[#allocation7 + $0x10] sm:$0xff]
    %v159 = vld [vmem:[#allocation7 + $0x18] sm:$0xff]
    %v160 = vld [vmem:[#allocation7 + $0x20] sm:$0xff]
    %v161 = vld [vmem:[#allocation7 + $0x28] sm:$0xff]
    %v162 = vld [vmem:[#allocation7 + $0x30] sm:$0xff]
    %v163 = vld [vmem:[#allocation7 + $0x38] sm:$0xff]
    %v164 = vld [vmem:[#allocation7 + $0x40] sm:$0xff]
    %v165 = vld [vmem:[#allocation7 + $0x48] sm:$0xff]
    %v166 = vld [vmem:[#allocation7 + $0x50] sm:$0xff]
    %v167 = vld [vmem:[#allocation7 + $0x58] sm:$0xff]
    %v168 = vld [vmem:[#allocation7 + $0x60] sm:$0xff]
    %v169 = vld [vmem:[#allocation7 + $0x68] sm:$0xff]
    %v170 = vld [vmem:[#allocation7 + $0x70] sm:$0xff]
    %v171 = vld [vmem:[#allocation7 + $0x78] sm:$0xff]
    %v172 = vld [vmem:[%s4] sm:$0x1]
    %v174 = vlaneseq
    %v175 = vshrl.u32 %v174, 7
    %v176 = vsub.s32 0, %v175
    %v177 = vrot.slane %v172, %v176
    %179 = vmatprep.subr.mxu0 0.0
    %180 = vmatpush1.msra.mxu0 %v156
    %181 = vmatprep.subr.mxu0 0.0
    %182 = vmatpush1.msra.mxu0 %v157
    %183 = vmatprep.subr.mxu0 0.0
    %184 = vmatpush1.msra.mxu0 %v158
    %185 = vmatprep.subr.mxu0 0.0
    %186 = vmatpush1.msra.mxu0 %v159
    %187 = vmatprep.subr.mxu0 0.0
    %188 = vmatpush1.msra.mxu0 %v160
    %189 = vmatprep.subr.mxu0 0.0
    %190 = vmatpush1.msra.mxu0 %v161
    %191 = vmatprep.subr.mxu0 0.0
    %192 = vmatpush1.msra.mxu0 %v162
    %193 = vmatprep.subr.mxu0 0.0
    %194 = vmatpush1.msra.mxu0 %v163
    %195 = vmatprep.subr.mxu0 0.0
    %196 = vmatpush1.msra.mxu0 %v164
    %197 = vmatprep.subr.mxu0 0.0
    %198 = vmatpush1.msra.mxu0 %v165
    %199 = vmatprep.subr.mxu0 0.0
    %200 = vmatpush1.msra.mxu0 %v166
    %201 = vmatprep.subr.mxu0 0.0
    %202 = vmatpush1.msra.mxu0 %v167
    %203 = vmatprep.subr.mxu0 0.0
    %204 = vmatpush1.msra.mxu0 %v168
    %205 = vmatprep.subr.mxu0 0.0
    %206 = vmatpush1.msra.mxu0 %v169
    %207 = vmatprep.subr.mxu0 0.0
    %208 = vmatpush1.msra.mxu0 %v170
    %209 = vmatprep.subr.mxu0 0.0
    %210 = vmatpush1.msra.mxu0 %v171
    %211 = vmatprep.subr.mxu0 0.0
    %212 = vmatpush1.msra.mxu0 0.0
    %213 = vmatprep.subr.mxu0 0.0
    %214 = vmatpush1.msra.mxu0 0.0
    %215 = vmatprep.subr.mxu0 0.0
    %216 = vmatpush1.msra.mxu0 0.0
    %217 = vmatprep.subr.mxu0 0.0
    %218 = vmatpush1.msra.mxu0 0.0
    %219 = vmatprep.subr.mxu0 0.0
    %220 = vmatpush1.msra.mxu0 0.0
    %221 = vmatprep.subr.mxu0 0.0
    %222 = vmatpush1.msra.mxu0 0.0
    %223 = vmatprep.subr.mxu0 0.0
    %224 = vmatpush1.msra.mxu0 0.0
    %225 = vmatprep.subr.mxu0 0.0
    %226 = vmatpush1.msra.mxu0 0.0
    %227 = vmatprep.subr.mxu0 0.0
    %228 = vmatpush1.msra.mxu0 0.0
    %229 = vmatprep.subr.mxu0 0.0
    %230 = vmatpush1.msra.mxu0 0.0
    %231 = vmatprep.subr.mxu0 0.0
    %232 = vmatpush1.msra.mxu0 0.0
    %233 = vmatprep.subr.mxu0 0.0
    %234 = vmatpush1.msra.mxu0 0.0
    %235 = vmatprep.subr.mxu0 0.0
    %236 = vmatpush1.msra.mxu0 0.0
    %237 = vmatprep.subr.mxu0 0.0
    %238 = vmatpush1.msra.mxu0 0.0
    %239 = vmatprep.subr.mxu0 0.0
    %240 = vmatpush1.msra.mxu0 0.0
    %241 = vmatprep.subr.mxu0 0.0
    %242 = vmatpush1.msra.mxu0 0.0
    %243 = vmatprep.mubr.f32.mxu0 0.0
    %244 = vmatmul.mubr.f32.gmra.mrb[0].mxu0 %v155
    %v245 = vpop.f32.mrb[0].mxu0
    %v246 = vadd.f32 %v177, %v245
    %v247 = vpop.f32.mrb[0].mxu0
    %248 = vdwg.mxu0
    %249 = vst [vmem:[#allocation8] sm:$0xff] %v246
    // Predicated region
    $region34: #{tpu_custom_call.1} parent=1 // pred_check
      _
    $region35: #{tpu_custom_call.1} parent=1 // pred_check_branch
      %251 = sbr.rel (0) target = $region37
    $region36: #{tpu_custom_call.1} parent=1 // pred_region
      %s253 = ssub.s32 128, 128
      %254 = vsyncadd [#allocation4], %s253
      %s256 = sshll.u32 [#allocation8], 4
      %s257 = int_to_ptr.vmem [resolvable:$true] %s256
      %259 = dma.vmem_to_hbm [thread:$0]  %s257, 128, %s5, [#allocation4]
    $region37: #{tpu_custom_call.1} parent=1 // pred_fallthru
      _
    // Predicated region
    $region38: #{tpu_custom_call.1} parent=1 // pred_check
      _
    $region39: #{tpu_custom_call.1} parent=1 // pred_check_branch
      %261 = sbr.rel (0) target = $region41
    $region40: #{tpu_custom_call.1} parent=1 // pred_region
      %262 = dma.done [#allocation4], 128
    $region41: #{tpu_custom_call.1} parent=1 // pred_fallthru
      _
    %263 = vsyncpa [#allocation3], 1
    %264 = vsyncpa [#allocation6], 1
    %265 = vsyncpa [#allocation4], 1

</llo_original>
